<compile_context>
chip_gen: v6e
topology: v6e:2x2x1
jax: 0.10.0
libtpu: 0.0.40
codegen_flags: <defaults>
</compile_context>

<pallas_src>
import functools

import jax
import jax.numpy as jnp
from jax.experimental import pallas as pl
from jax.experimental.pallas import tpu as pltpu


# ---------------- generation-aware sizing helpers ----------------

def _round_up(x, m):
    return ((x + m - 1) // m) * m


def _tpu_params():
    """One VMEM budget per TPU generation (used for BOTH tile sizing and
    vmem_limit_bytes) and the TensorCore count (for the D-split decision)."""
    try:
        kind = jax.devices()[0].device_kind.lower()
    except Exception:
        kind = ""
    if ("v7" in kind) or ("7x" in kind):
        # v7x: 64 MiB physical VMEM per TC, 2 TCs -> leave ~16 MiB headroom.
        return 48 * 1024 * 1024, 2
    if ("v6" in kind) or ("v5e" in kind) or ("v5 lite" in kind) or ("lite" in kind):
        # v5e / v6e: 128 MiB physical VMEM, single TC -> ~100 MiB budget.
        return 100 * 1024 * 1024, 1
    # Unknown generation: conservative v7x-style budget, single TC.
    return 48 * 1024 * 1024, 1


def _sublane_multiple(itemsize):
    """Sublane-packing multiple for the L-tile: 8 (f32), 16 (bf16), 32 (1-byte)."""
    return max(8, 32 // max(1, itemsize))


def _choose_dt(D, num_tc):
    """Feature-tile width.
    Single-TC chips: dt = D (no split) -- contiguous [lt, D] rows per batch element,
    fewer grid steps, lane-dense stores; the 'parallel' D axis buys nothing with 1 TC.
    2-TC chips (v7x): balanced 2-way split (dt = D/2) when that is lane-dense
    (multiple of 128) so both cores stream HBM with the widest possible rows."""
    if num_tc <= 1:
        return D
    half = D // 2
    if D % 2 == 0 and half % 128 == 0:
        return half
    return D


def _choose_lt(B, L, dt, itemsize, budget_bytes, input_buffers):
    """Largest sublane-aligned L-tile whose FULL VMEM footprint fits the budget:
    input_buffers x [B, lt, dt] input + double-buffered [B, dt] f32 output
    + double-buffered gamma/beta."""
    sub = _sublane_multiple(itemsize)
    fixed = 2 * B * dt * 4 + 2 * 2 * dt * 4          # output + gamma/beta buffers
    avail = max(0, budget_bytes - fixed)
    cap = avail // max(1, input_buffers * B * dt * itemsize)
    cap = max(sub, (cap // sub) * sub)
    lt = min(cap, _round_up(L, sub))
    return max(sub, (lt // sub) * sub)


# ---------------- fused kernel: sum over L + BatchNorm1d (train-mode stats) ----------------

def _fused_sum_bn_kernel(x_ref, gamma_ref, beta_ref, o_ref, *, seq_len, lt):
    l = pl.program_id(1)
    last = pl.num_programs(1) - 1

    @pl.when(l == 0)
    def _init():
        o_ref[...] = jnp.zeros_like(o_ref)

    x = x_ref[...].astype(jnp.float32)                 # [B, lt, dt], f32 accumulation

    if seq_len % lt != 0:
        # Ragged tail: only the LAST L-tile needs masking (OOB rows of an edge block
        # are not guaranteed to be zero). Steady-state iterations stay mask-free.
        @pl.when(l != last)
        def _accum_full():
            o_ref[...] += jnp.sum(x, axis=1)           # [B, dt] sublane (XLU) reduce

        @pl.when(l == last)
        def _accum_masked():
            row = jax.lax.broadcasted_iota(jnp.int32, x.shape, 1) + l * lt
            o_ref[...] += jnp.sum(jnp.where(row < seq_len, x, 0.0), axis=1)
    else:
        o_ref[...] += jnp.sum(x, axis=1)

    @pl.when(l == last)
    def _finalize():
        # BatchNorm1d (training-mode batch stats): requires the FULL batch resident
        # in this output block -- the batch dimension must never be tiled.
        feats = o_ref[...]                             # accumulated sums, [B, dt] f32
        n = feats.shape[0]
        mean = jnp.sum(feats, axis=0, keepdims=True) * (1.0 / n)
        xc = feats - mean
        var = jnp.sum(xc * xc, axis=0, keepdims=True) * (1.0 / n)   # biased (torch BN fwd)
        inv = jax.lax.rsqrt(var + 1e-5)
        o_ref[...] = xc * inv * gamma_ref[...] + beta_ref[...]


def sum_and_batchnorm(x, gamma, beta, *, vmem_budget_bytes=None, input_buffers=2):
    """x: [B, L, D] (bf16 or f32) -> [B, D] f32 = BatchNorm1d(sum_L x) with batch stats."""
    B, L, D = x.shape
    itemsize = jnp.dtype(x.dtype).itemsize

    budget, num_tc = _tpu_params()
    if vmem_budget_bytes is not None:
        budget = int(vmem_budget_bytes)

    dt = _choose_dt(D, num_tc)
    lt = _choose_lt(B, L, dt, itemsize, budget, input_buffers)
    nd = D // dt
    nl = pl.cdiv(L, lt)

    # BatchNorm stats are taken over axis 0 of the resident output block ->
    # the batch dimension must cover the whole batch (never tile B).
    out_block = (B, dt)
    assert out_block[0] == B, "batch dimension must not be tiled (BN batch stats)"

    cost = pl.CostEstimate(
        flops=int(B * L * D + 8 * B * D),
        transcendentals=int(D),
        bytes_accessed=int(B * L * D * itemsize + (B + 2) * D * 4),
    )

    # Deepen input pipelining only on request (e.g. profiling shows exposed DMA with
    # small blocks); the extra buffer is already accounted for in _choose_lt.
    x_spec_kwargs = {}
    if input_buffers > 2:
        x_spec_kwargs["pipeline_mode"] = pl.Buffered(input_buffers)
    x_spec = pl.BlockSpec((B, lt, dt), lambda d, l: (0, l, d), **x_spec_kwargs)

    kernel = functools.partial(_fused_sum_bn_kernel, seq_len=L, lt=lt)
    return pl.pallas_call(
        kernel,
        out_shape=jax.ShapeDtypeStruct((B, D), jnp.float32),
        grid_spec=pltpu.PrefetchScalarGridSpec(
            num_scalar_prefetch=0,
            grid=(nd, nl),                              # (parallel D, arbitrary L)
            in_specs=[
                x_spec,
                pl.BlockSpec((1, dt), lambda d, l: (0, d)),
                pl.BlockSpec((1, dt), lambda d, l: (0, d)),
            ],
            out_specs=pl.BlockSpec(out_block, lambda d, l: (0, d)),
        ),
        compiler_params=pltpu.CompilerParams(
            dimension_semantics=("parallel", "arbitrary"),
            vmem_limit_bytes=budget,                    # same value used for tile sizing
        ),
        cost_estimate=cost,
    )(x,
      gamma.reshape(1, D).astype(jnp.float32),
      beta.reshape(1, D).astype(jnp.float32))


# ---------------- SimpleAverager forward ----------------

def simple_averager_forward(token_reps, total_pll, gamma, beta, *, use_pll=True):
    """
    token_reps: [B, L, D]  per-token encoder representations (zero-padded), bf16 or f32
    total_pll : [B, 1]     total pseudo-log-likelihood feature (used iff use_pll)
    gamma,beta: [D + int(use_pll)]  BatchNorm1d affine params
    returns   : [B, D + int(use_pll)] float32
    """
    B, L, D = token_reps.shape
    out_tok = sum_and_batchnorm(token_reps, gamma[:D], beta[:D])    # fused kernel
    if not use_pll:
        return out_tok
    # BatchNorm of the single PLL column ([B, 1]) + concat: scalar-sized JAX glue.
    pll = total_pll.astype(jnp.float32)
    mu = jnp.mean(pll, axis=0, keepdims=True)
    var = jnp.mean((pll - mu) ** 2, axis=0, keepdims=True)
    pll_bn = (pll - mu) * jax.lax.rsqrt(var + 1e-5) * gamma[D] + beta[D]
    return jnp.concatenate([out_tok, pll_bn], axis=-1)


if __name__ == "__main__":
    B, L, D = 2, 16, 32          # batch, seq_len, encoder embed_dim
    use_pll = True
    embed_dim = D + int(use_pll)

    key = jax.random.PRNGKey(0)
    k1, k2 = jax.random.split(key)
    # bf16 token reps (memory-bound kernel -> halve HBM traffic); f32 accumulation inside.
    token_reps = jax.random.normal(k1, (B, L, D), dtype=jnp.float32).astype(jnp.bfloat16)
    # simulate zero padding of variable-length proteins
    token_reps = token_reps.at[1, 12:, :].set(0.0)
    total_pll = jax.random.normal(k2, (B, 1), dtype=jnp.float32)

    # torch.nn.BatchNorm1d default init: weight=1, bias=0
    gamma = jnp.ones((embed_dim,), jnp.float32)
    beta = jnp.zeros((embed_dim,), jnp.float32)

    out = simple_averager_forward(token_reps, total_pll, gamma, beta, use_pll=use_pll)
    out = jax.block_until_ready(out)

    # pure-JAX reference check (same bf16 inputs, f32 math)
    ref_sum = jnp.sum(token_reps.astype(jnp.float32), axis=1)
    ref_feats = jnp.concatenate([ref_sum, total_pll.astype(jnp.float32)], axis=-1)
    mu = ref_feats.mean(axis=0, keepdims=True)
    var = ((ref_feats - mu) ** 2).mean(axis=0, keepdims=True)
    ref = (ref_feats - mu) / jnp.sqrt(var + 1e-5) * gamma + beta

    assert out.shape == (B, embed_dim)
    assert jnp.allclose(out, ref, atol=1e-3, rtol=1e-3), jnp.max(jnp.abs(out - ref))

    print("KERNEL_OK")
</pallas_src>

<mosaic_0001>
module attributes {stable_mosaic.version = 11 : i64} {
  func.func @_fused_sum_bn_kernel(%arg0: i32, %arg1: i32, %arg2: memref<2x16x32xbf16, #tpu.memory_space<vmem>>, %arg3: memref<1x32xf32, #tpu.memory_space<vmem>>, %arg4: memref<1x32xf32, #tpu.memory_space<vmem>>, %arg5: memref<2x32xf32, #tpu.memory_space<vmem>>) attributes {dimension_semantics = [#tpu.dimension_semantics<parallel>, #tpu.dimension_semantics<arbitrary>], iteration_bounds = array<i64: 1, 1>, scalar_prefetch = 0 : i64, scratch_operands = 0 : i64, tpu.core_type = #tpu.core_type<tc>, window_params = [{transform_indices = @transform_0, window_bounds = array<i64: 2, 16, 32>}, {transform_indices = @transform_1, window_bounds = array<i64: 1, 32>}, {transform_indices = @transform_2, window_bounds = array<i64: 1, 32>}, {transform_indices = @transform_3, window_bounds = array<i64: 2, 32>}]} {
    %c0_i32 = arith.constant 0 : i32
    %0 = arith.cmpi eq, %arg1, %c0_i32 : i32
    %1 = arith.extui %0 : i1 to i32
    %c0_i32_0 = arith.constant 0 : i32
    %2 = arith.cmpi ne, %1, %c0_i32_0 : i32
    scf.if %2 {
      %cst_9 = arith.constant 0.000000e+00 : f32
      %12 = vector.broadcast %cst_9 : f32 to vector<2x32xf32>
      %c0_10 = arith.constant 0 : index
      %c0_11 = arith.constant 0 : index
      %13 = vector.load %arg5[%c0_10, %c0_11] : memref<2x32xf32, #tpu.memory_space<vmem>>, vector<2x32xf32>
      tpu.vector_store %arg5[%c0_10, %c0_11], %12 {strides = array<i32>} : memref<2x32xf32, #tpu.memory_space<vmem>>, vector<2x32xf32>,
    } else {
    }
    %c0 = arith.constant 0 : index
    %c0_1 = arith.constant 0 : index
    %c0_2 = arith.constant 0 : index
    %3 = vector.load %arg2[%c0, %c0_1, %c0_2] : memref<2x16x32xbf16, #tpu.memory_space<vmem>>, vector<2x16x32xbf16>
    %4 = arith.extf %3 : vector<2x16x32xbf16> to vector<2x16x32xf32>
    %c0_3 = arith.constant 0 : index
    %c0_4 = arith.constant 0 : index
    %5 = vector.load %arg5[%c0_3, %c0_4] : memref<2x32xf32, #tpu.memory_space<vmem>>, vector<2x32xf32>
    %cst = arith.constant dense<0.000000e+00> : vector<2x32xf32>
    %6 = vector.multi_reduction <add>, %4, %cst [1] : vector<2x16x32xf32> to vector<2x32xf32>
    %7 = arith.addf %5, %6 : vector<2x32xf32>
    %c0_5 = arith.constant 0 : index
    %c0_6 = arith.constant 0 : index
    %8 = vector.load %arg5[%c0_5, %c0_6] : memref<2x32xf32, #tpu.memory_space<vmem>>, vector<2x32xf32>
    tpu.vector_store %arg5[%c0_5, %c0_6], %7 {strides = array<i32>} : memref<2x32xf32, #tpu.memory_space<vmem>>, vector<2x32xf32>,
    %c0_i32_7 = arith.constant 0 : i32
    %9 = arith.cmpi eq, %arg1, %c0_i32_7 : i32
    %10 = arith.extui %9 : i1 to i32
    %c0_i32_8 = arith.constant 0 : i32
    %11 = arith.cmpi ne, %10, %c0_i32_8 : i32
    scf.if %11 {
      %c0_9 = arith.constant 0 : index
      %c0_10 = arith.constant 0 : index
      %12 = vector.load %arg5[%c0_9, %c0_10] : memref<2x32xf32, #tpu.memory_space<vmem>>, vector<2x32xf32>
      %cst_11 = arith.constant dense<0.000000e+00> : vector<32xf32>
      %13 = vector.multi_reduction <add>, %12, %cst_11 [0] : vector<2x32xf32> to vector<32xf32>
      %14 = vector.shape_cast %13 : vector<32xf32> to vector<1x32xf32>
      %cst_12 = arith.constant 5.000000e-01 : f32
      %15 = vector.broadcast %cst_12 : f32 to vector<1x32xf32>
      %16 = arith.mulf %14, %15 : vector<1x32xf32>
      %17 = vector.broadcast %16 : vector<1x32xf32> to vector<2x32xf32>
      %18 = arith.subf %12, %17 : vector<2x32xf32>
      %19 = arith.mulf %18, %18 : vector<2x32xf32>
      %cst_13 = arith.constant dense<0.000000e+00> : vector<32xf32>
      %20 = vector.multi_reduction <add>, %19, %cst_13 [0] : vector<2x32xf32> to vector<32xf32>
      %21 = vector.shape_cast %20 : vector<32xf32> to vector<1x32xf32>
      %cst_14 = arith.constant 5.000000e-01 : f32
      %22 = vector.broadcast %cst_14 : f32 to vector<1x32xf32>
      %23 = arith.mulf %21, %22 : vector<1x32xf32>
      %cst_15 = arith.constant 9.99999974E-6 : f32
      %24 = vector.broadcast %cst_15 : f32 to vector<1x32xf32>
      %25 = arith.addf %23, %24 : vector<1x32xf32>
      %26 = math.rsqrt %25 : vector<1x32xf32>
      %27 = vector.broadcast %26 : vector<1x32xf32> to vector<2x32xf32>
      %28 = arith.mulf %18, %27 : vector<2x32xf32>
      %c0_16 = arith.constant 0 : index
      %c0_17 = arith.constant 0 : index
      %29 = vector.load %arg3[%c0_16, %c0_17] : memref<1x32xf32, #tpu.memory_space<vmem>>, vector<1x32xf32>
      %30 = vector.broadcast %29 : vector<1x32xf32> to vector<2x32xf32>
      %31 = arith.mulf %28, %30 : vector<2x32xf32>
      %c0_18 = arith.constant 0 : index
      %c0_19 = arith.constant 0 : index
      %32 = vector.load %arg4[%c0_18, %c0_19] : memref<1x32xf32, #tpu.memory_space<vmem>>, vector<1x32xf32>
      %33 = vector.broadcast %32 : vector<1x32xf32> to vector<2x32xf32>
      %34 = arith.addf %31, %33 : vector<2x32xf32>
      %c0_20 = arith.constant 0 : index
      %c0_21 = arith.constant 0 : index
      %35 = vector.load %arg5[%c0_20, %c0_21] : memref<2x32xf32, #tpu.memory_space<vmem>>, vector<2x32xf32>
      tpu.vector_store %arg5[%c0_20, %c0_21], %34 {strides = array<i32>} : memref<2x32xf32, #tpu.memory_space<vmem>>, vector<2x32xf32>,
    } else {
    }
    return
  }
  func.func @transform_0(%arg0: i32, %arg1: i32) -> (i32, i32, i32) {
    %c0_i32 = arith.constant 0 : i32
    %c0_i32_0 = arith.constant 0 : i32
    return %c0_i32, %arg1, %arg0 : i32, i32, i32
  }
  func.func @transform_1(%arg0: i32, %arg1: i32) -> (i32, i32) {
    %c0_i32 = arith.constant 0 : i32
    %c0_i32_0 = arith.constant 0 : i32
    return %c0_i32, %arg0 : i32, i32
  }
  func.func @transform_2(%arg0: i32, %arg1: i32) -> (i32, i32) {
    %c0_i32 = arith.constant 0 : i32
    %c0_i32_0 = arith.constant 0 : i32
    return %c0_i32, %arg0 : i32, i32
  }
  func.func @transform_3(%arg0: i32, %arg1: i32) -> (i32, i32) {
    %c0_i32 = arith.constant 0 : i32
    %c0_i32_0 = arith.constant 0 : i32
    return %c0_i32, %arg0 : i32, i32
  }
}

</mosaic_0001>

<llo_original>
// kernel: tpu_custom_call.1
$region0: #{tpu_custom_call.1}
  #allocation0 [shape = 'u32[]', space=smem, size = 0x4, offset = 0x4, fixed_abs, tag = 'smem constant byte address 0x4 - core index']
  #allocation1 [shape = 'u32[144,128]{1,0:T(1,128)}', space=vmem, size = 0x12000, scoped, tag = 'internal scratch']
  %s0 = inlined_call_operand.hbm [shape: bf16[2,16,32], index: 0, kind: input, shape index: {}]
  %s1 = inlined_call_operand.vmem [shape: f32[1,32], index: 1, kind: input, shape index: {}]
  %s2 = inlined_call_operand.vmem [shape: f32[1,32], index: 2, kind: input, shape index: {}]
  %s3 = inlined_call_operand.hbm [shape: f32[2,32], index: 3, kind: output, shape index: {}]
  %s4 = sld [smem:[#allocation0]]
  $region34: #{tpu_custom_call.1} parent=0
    _
  %s6 = ssub.s32 1, %s4
  %s7 = scalar_select 0, %s6, %s4
  $region1: #{tpu_custom_call.1} parent=0
    #allocation2 [shape = 'u8[8192]{0}', space=vmem, size = 0x2000, scoped, tag = 'input window, operand 0, single buffered']
    #allocation3 [shape = 's32[1]{0}', space=sflag, size = 0x4, scoped, tag = 'scoped memory for tpu_custom_call.1']
    #allocation4 [shape = 's32[1]{0}', space=sflag, size = 0x4, scoped, tag = 'scoped memory for tpu_custom_call.1']
    #allocation5 [shape = 'u8[1024]{0}', space=vmem, size = 0x400, scoped, tag = 'output window, operand 0, single buffered']
    %8 = vsyncpa [#allocation3], 0
    %9 = vsyncpa [#allocation4], 0
    // Predicated region
    $region2: #{tpu_custom_call.1} parent=1 // pred_check
      _
    $region3: #{tpu_custom_call.1} parent=1 // pred_check_branch
      %11 = sbr.rel (0) target = $region5
    $region4: #{tpu_custom_call.1} parent=1 // pred_region
      %s13 = ssub.s32 256, 256
      %14 = vsyncadd [#allocation3], %s13
      %s15 = sshll.u32 [#allocation2], 4
      %s16 = int_to_ptr.vmem [resolvable:$true] %s15
      %21 = dma.hbm_to_vmem [thread:$0]  %s0, 256, %s16, [#allocation3], 64, 64, 4
    $region5: #{tpu_custom_call.1} parent=1 // pred_fallthru
      _
    // Predicated region
    $region6: #{tpu_custom_call.1} parent=1 // pred_check
      _
    $region7: #{tpu_custom_call.1} parent=1 // pred_check_branch
      %23 = sbr.rel (0) target = $region9
    $region8: #{tpu_custom_call.1} parent=1 // pred_region
      _
    $region9: #{tpu_custom_call.1} parent=1 // pred_fallthru
      _
    // Predicated region
    $region10: #{tpu_custom_call.1} parent=1 // pred_check
      _
    $region11: #{tpu_custom_call.1} parent=1 // pred_check_branch
      %25 = sbr.rel (0) target = $region13
    $region12: #{tpu_custom_call.1} parent=1 // pred_region
      _
    $region13: #{tpu_custom_call.1} parent=1 // pred_fallthru
      _
    // Predicated region
    $region14: #{tpu_custom_call.1} parent=1 // pred_check
      _
    $region15: #{tpu_custom_call.1} parent=1 // pred_check_branch
      %27 = sbr.rel (0) target = $region17
    $region16: #{tpu_custom_call.1} parent=1 // pred_region
      %28 = dma.done [#allocation3], 256
    $region17: #{tpu_custom_call.1} parent=1 // pred_fallthru
      _
    %p29 = scmp.eq.s32.totalorder 0, 0
    // Predicated region
    $region18: #{tpu_custom_call.1} parent=1 // pred_check
      %p30 = pneg %p29
    $region19: #{tpu_custom_call.1} parent=1 // pred_check_branch
      %32 = sbr.rel (%p30) target = $region21
    $region20: #{tpu_custom_call.1} parent=1 // pred_region
      %vm33 = vcmask 254976
      %34 = vst.msk [vmem:[#allocation5] sm:$0x3] %vm33, 0.0
    $region21: #{tpu_custom_call.1} parent=1 // pred_fallthru
      _
    %v35 = vld [vmem:[#allocation2] sm:$0xf]
    %v36 = vld [vmem:[#allocation2 + $0x4] sm:$0xf]
    %v37 = vld [vmem:[#allocation2 + $0x8] sm:$0xf]
    %v38 = vld [vmem:[#allocation2 + $0xc] sm:$0xf]
    %v39 = vunpack.c.l.bf16 %v35
    %v40 = vunpack.c.l.bf16 %v36
    %v41 = vunpack.c.l.bf16 %v37
    %v42 = vunpack.c.l.bf16 %v38
    %v43 = vld [vmem:[#allocation5] sm:$0x3]
    %vm44 = vcmask 261120
    %v45 = vsel %vm44, %v39, 0.0
    %v46 = vsel %vm44, %v40, 0.0
    %v47 = vadd.f32 %v45, %v46
    %v48 = vrot.slane %v47, 4
    %v49 = vadd.f32 %v47, %v48
    %v50 = vrot.slane %v49, 2
    %v51 = vadd.f32 %v49, %v50
    %v52 = vrot.slane %v51, 1
    %v53 = vadd.f32 %v51, %v52
    %v54 = vsel %vm44, %v41, 0.0
    %v55 = vsel %vm44, %v42, 0.0
    %v56 = vadd.f32 %v54, %v55
    %v57 = vrot.slane %v56, 4
    %v58 = vadd.f32 %v56, %v57
    %v59 = vrot.slane %v58, 2
    %v60 = vadd.f32 %v58, %v59
    %v61 = vrot.slane %v60, 1
    %v62 = vadd.f32 %v60, %v61
    %vm65 = vcmask 1041409
    %v66 = vsel %vm65, %v62, %v53
    %v68 = vadd.f32 %v43, %v66
    %vm69 = vcmask 254976
    %70 = vst.msk [vmem:[#allocation5] sm:$0x3] %vm69, %v68
    // Predicated region
    $region22: #{tpu_custom_call.1} parent=1 // pred_check
      %p71 = pneg %p29
    $region23: #{tpu_custom_call.1} parent=1 // pred_check_branch
      %73 = sbr.rel (%p71) target = $region25
    $region24: #{tpu_custom_call.1} parent=1 // pred_region
      %v74 = vld [vmem:[#allocation5] sm:$0x3]
      %v75 = vsel %vm69, %v74, 0.0
      %v76 = vrot.slane %v75, 4
      %v77 = vadd.f32 %v75, %v76
      %v78 = vrot.slane %v77, 2
      %v79 = vadd.f32 %v77, %v78
      %v80 = vrot.slane %v79, 1
      %v81 = vadd.f32 %v79, %v80
      %v82 = vmul.f32 %v81, 0.5
      %v83 = vsub.f32 %v74, %v82
      %v84 = vmul.f32 %v83, %v83
      %v85 = vsel %vm69, %v84, 0.0
      %v86 = vrot.slane %v85, 4
      %v87 = vadd.f32 %v85, %v86
      %v88 = vrot.slane %v87, 2
      %v89 = vadd.f32 %v87, %v88
      %v90 = vrot.slane %v89, 1
      %v91 = vadd.f32 %v89, %v90
      %v92 = vmul.f32 %v91, 0.5
      %v93 = vadd.f32 %v92, 1e-05
      %v94 = vrsqrt.pop %v93
      %v95 = vmul.f32 %v83, %v94
      %v96 = vld [vmem:[%s1] sm:$0x1]
      %v98 = vlaneseq
      %v99 = vshrl.u32 %v98, 7
      %v100 = vsub.s32 0, %v99
      %v101 = vrot.slane %v96, %v100
      %v103 = vmul.f32 %v95, %v101
      %v104 = vld [vmem:[%s2] sm:$0x1]
      %v106 = vlaneseq
      %v107 = vshrl.u32 %v106, 7
      %v108 = vsub.s32 0, %v107
      %v109 = vrot.slane %v104, %v108
      %v111 = vadd.f32 %v103, %v109
      %112 = vst.msk [vmem:[#allocation5] sm:$0x3] %vm69, %v111
    $region25: #{tpu_custom_call.1} parent=1 // pred_fallthru
      _
    // Predicated region
    $region26: #{tpu_custom_call.1} parent=1 // pred_check
      _
    $region27: #{tpu_custom_call.1} parent=1 // pred_check_branch
      %114 = sbr.rel (0) target = $region29
    $region28: #{tpu_custom_call.1} parent=1 // pred_region
      %s116 = ssub.s32 32, 32
      %117 = vsyncadd [#allocation4], %s116
      %s119 = sshll.u32 [#allocation5], 4
      %s120 = int_to_ptr.vmem [resolvable:$true] %s119
      %122 = dma.vmem_to_hbm [thread:$0]  %s120, 32, %s3, [#allocation4]
    $region29: #{tpu_custom_call.1} parent=1 // pred_fallthru
      _
    // Predicated region
    $region30: #{tpu_custom_call.1} parent=1 // pred_check
      _
    $region31: #{tpu_custom_call.1} parent=1 // pred_check_branch
      %124 = sbr.rel (0) target = $region33
    $region32: #{tpu_custom_call.1} parent=1 // pred_region
      %125 = dma.done [#allocation4], 32
    $region33: #{tpu_custom_call.1} parent=1 // pred_fallthru
      _
    %126 = vsyncpa [#allocation3], 1
    %127 = vsyncpa [#allocation4], 1

</llo_original>
